<compile_context>
chip_gen: v5e
topology: v5e:2x2
jax: 0.10.0
libtpu: 0.0.40
codegen_flags: <defaults>
</compile_context>

<pallas_src>
import functools

import jax
import jax.numpy as jnp
from jax import lax
from jax.experimental import pallas as pl
from jax.experimental.pallas import tpu as pltpu


NUM_GROUPS = 8     # MONAI SegResNet GroupNorm default
EPS = 1e-5


def _group_combine(col, num_groups, group_size):
    # col: (C, 1) per-channel partial sums -> per-group totals broadcast back to (C, 1).
    g = jnp.sum(col.reshape(num_groups, group_size), axis=1, keepdims=True)   # (G, 1)
    return jnp.broadcast_to(g, (num_groups, group_size)).reshape(col.shape)


# ------------------------------ fused kernel -------------------------------- #

def _sts2d_fused_kernel(x_ref, mask_ref,
                        w0_ref, w1_ref, w2_ref, wh_ref, pk_ref,
                        out_ref,
                        *, B, H, W, num_groups, eps):
    HW = H * W
    L = B * HW
    C = x_ref.shape[0]
    gs = C // num_groups

    # Loaded once, reused by all three convs (no per-tap broadcasts).
    mask = mask_ref[...]                                  # (9*C, L) f32

    # Packed per-channel params: one small operand instead of nine.
    pk = pk_ref[...]                                      # (C, 9) f32
    b0, g1, t1 = pk[:, 0:1], pk[:, 1:2], pk[:, 2:3]
    b1, g2, t2 = pk[:, 3:4], pk[:, 4:5], pk[:, 5:6]
    b2, g3, t3 = pk[:, 6:7], pk[:, 7:8], pk[:, 8:9]

    def conv3x3(x2, w_ref, bias):
        # x2: (C, L) f32; w_ref: (C, 9*C) bf16; bias: (C, 1) f32.
        # im2col: tap (ky, kx) needs x[y+ky-1, x+kx-1] -> flattened shift
        # s = (ky-1)*W + (kx-1).  pltpu.roll follows jnp.roll semantics
        # (result[p] = x[(p - shift) mod L]), so shift = (-s) % L.  One
        # full-slab mask multiply zeroes out-of-image taps (which also covers
        # any cross-sample wrap in the batch-folded layout).
        slabs = []
        for ky in range(3):
            for kx in range(3):
                s = (ky - 1) * W + (kx - 1)
                slabs.append(x2 if s == 0 else pltpu.roll(x2, (-s) % L, axis=1))
        patches = (jnp.concatenate(slabs, axis=0) * mask).astype(w_ref.dtype)
        return jnp.dot(w_ref[...], patches,
                       preferred_element_type=jnp.float32) + bias

    def gn_relu(x2, gamma, beta):
        # Per-sample GroupNorm (biased variance, one-pass) + affine + ReLU.
        n = float(gs * HW)
        pieces = []
        for b in range(B):                                 # static, B is small
            xb = x2[:, b * HW:(b + 1) * HW]                # lane-tile-aligned slice
            s1 = jnp.sum(xb, axis=1, keepdims=True)        # (C, 1)
            s2 = jnp.sum(xb * xb, axis=1, keepdims=True)   # (C, 1)
            if gs > 1:
                # TODO(synk): only exercised when C > num_groups (SegResNet_32/64).
                s1 = _group_combine(s1, num_groups, gs)
                s2 = _group_combine(s2, num_groups, gs)
            mean = s1 * (1.0 / n)
            var = jnp.maximum(s2 * (1.0 / n) - mean * mean, 0.0)
            inv = lax.rsqrt(var + eps)
            pieces.append((xb - mean) * inv)
        y = pieces[0] if B == 1 else jnp.concatenate(pieces, axis=1)   # (C, L)
        return jnp.maximum(y * gamma + beta, 0.0)

    x = x_ref[...].astype(jnp.float32)                     # (C, L)

    h = conv3x3(x, w0_ref, b0)                             # conv_init
    r = gn_relu(h, g1, t1)                                 # ResBlock
    r = conv3x3(r, w1_ref, b1)
    r = gn_relu(r, g2, t2)
    h = conv3x3(r, w2_ref, b2) + h                         # + identity skip
    r = gn_relu(h, g3, t3)                                 # head: GN+ReLU -> 1x1 conv
    # Head bias folded into the augmented weight: out = [W | b] @ [r ; 1].
    r_aug = jnp.concatenate([r, jnp.ones((1, L), jnp.float32)], axis=0)
    out = jnp.dot(wh_ref[...], r_aug.astype(wh_ref.dtype),
                  preferred_element_type=jnp.float32)
    out_ref[...] = out.astype(out_ref.dtype)


# ------------------------------ host-side glue ------------------------------ #

def _pack_conv3x3(w_hwio, cin_pad, dtype):
    # (3, 3, Cin, Cout) HWIO -> (Cout, 9*cin_pad), row order (ky*3+kx)*cin_pad + ci,
    # matching the kernel's im2col slab order; padded-in channels get zero weights.
    # TODO(synk): PyTorch checkpoints are OIHW; transpose to HWIO before packing.
    kh, kw, cin, cout = w_hwio.shape
    if cin < cin_pad:
        w_hwio = jnp.pad(w_hwio, ((0, 0), (0, 0), (0, cin_pad - cin), (0, 0)))
    return jnp.transpose(w_hwio.reshape(kh * kw * cin_pad, cout)).astype(dtype)


def _tap_masks(H, W):
    # (9, H*W): 1.0 where tap (ky, kx) reads a valid in-image pixel, else 0.0.
    pos = jnp.arange(H * W, dtype=jnp.int32)
    yc, xc = pos // W, pos % W
    rows = []
    for ky in range(3):
        for kx in range(3):
            oy, ox = ky - 1, kx - 1
            rows.append((yc + oy >= 0) & (yc + oy < H) &
                        (xc + ox >= 0) & (xc + ox < W))
    return jnp.stack(rows).astype(jnp.float32)


def sts2d_forward(params, x_nchw, num_groups=NUM_GROUPS, eps=EPS,
                  matmul_dtype=jnp.bfloat16):
    B, in_chans, H, W = x_nchw.shape
    HW = H * W
    L = B * HW
    C = params["conv_init_w"].shape[-1]                    # init_filters
    target = params["head_w"].shape[-1]
    assert C % num_groups == 0, "GroupNorm requires C % num_groups == 0"
    assert in_chans <= C

    # Batch folded into lanes: (B, Cin, H, W) -> (C, B*HW), channels zero-padded.
    # Input stays in its original dtype; the kernel casts.
    xf = jnp.transpose(x_nchw.reshape(B, in_chans, HW), (1, 0, 2)).reshape(in_chans, L)
    if in_chans < C:
        xf = jnp.pad(xf, ((0, C - in_chans), (0, 0)))

    # Validity mask pre-expanded once on the host to the patch-slab shape (9*C, L).
    mask = jnp.tile(jnp.repeat(_tap_masks(H, W), C, axis=0), (1, B))

    w0 = _pack_conv3x3(params["conv_init_w"], C, matmul_dtype)     # (C, 9*C) bf16
    w1 = _pack_conv3x3(params["rb_conv1_w"], C, matmul_dtype)
    w2 = _pack_conv3x3(params["rb_conv2_w"], C, matmul_dtype)
    wh_aug = jnp.concatenate(
        [jnp.transpose(params["head_w"]), params["head_b"].reshape(target, 1)],
        axis=1).astype(matmul_dtype)                               # (target, C+1)

    # Nine tiny per-channel vectors packed into a single (C, 9) operand.
    packed = jnp.stack([params["conv_init_b"], params["gn1_g"], params["gn1_b"],
                        params["rb_conv1_b"], params["gn2_g"], params["gn2_b"],
                        params["rb_conv2_b"], params["gn3_g"], params["gn3_b"]],
                       axis=1).astype(jnp.float32)

    kernel = functools.partial(_sts2d_fused_kernel, B=B, H=H, W=W,
                               num_groups=num_groups, eps=eps)
    vmem = pl.BlockSpec(memory_space=pltpu.MemorySpace.VMEM)

    out = pl.pallas_call(                                  # single invocation, no grid
        kernel,
        out_shape=jax.ShapeDtypeStruct((target, L), jnp.float32),
        in_specs=[vmem] * 7,
        out_specs=vmem,
    )(xf, mask, w0, w1, w2, wh_aug, packed)

    # (target, B*HW) -> NCHW
    return jnp.transpose(out.reshape(target, B, HW), (1, 0, 2)).reshape(B, target, H, W)


def init_params(key, in_chans, filters, target):
    ks = jax.random.split(key, 4)

    def w3(k, cin, cout):
        return jax.random.normal(k, (3, 3, cin, cout), jnp.float32) / jnp.sqrt(9.0 * cin)

    return {
        "conv_init_w": w3(ks[0], in_chans, filters),
        "conv_init_b": jnp.zeros((filters,), jnp.float32),
        "rb_conv1_w": w3(ks[1], filters, filters),
        "rb_conv1_b": jnp.zeros((filters,), jnp.float32),
        "rb_conv2_w": w3(ks[2], filters, filters),
        "rb_conv2_b": jnp.zeros((filters,), jnp.float32),
        "gn1_g": jnp.ones((filters,), jnp.float32),
        "gn1_b": jnp.zeros((filters,), jnp.float32),
        "gn2_g": jnp.ones((filters,), jnp.float32),
        "gn2_b": jnp.zeros((filters,), jnp.float32),
        "gn3_g": jnp.ones((filters,), jnp.float32),
        "gn3_b": jnp.zeros((filters,), jnp.float32),
        "head_w": jax.random.normal(ks[3], (filters, target), jnp.float32)
                  / jnp.sqrt(float(filters)),
        "head_b": jnp.zeros((target,), jnp.float32),
    }


if __name__ == "__main__":
    key = jax.random.PRNGKey(0)
    kx, kp = jax.random.split(key)

    B, in_chans, H, W = 2, 3, 16, 16
    target = 1
    init_filters = 8       # 'SegResNet_8' branch

    x = jax.random.normal(kx, (B, in_chans, H, W), jnp.float32)
    params = init_params(kp, in_chans, init_filters, target)

    fwd = jax.jit(functools.partial(sts2d_forward, params))
    out = jax.block_until_ready(fwd(x))
    assert out.shape == (B, target, H, W), out.shape
    assert bool(jnp.all(jnp.isfinite(out)))
    print("KERNEL_OK")
</pallas_src>

<mosaic_0001>
module attributes {stable_mosaic.version = 11 : i64} {
  func.func @_sts2d_fused_kernel(%arg0: memref<8x512xf32, #tpu.memory_space<vmem>>, %arg1: memref<72x512xf32, #tpu.memory_space<vmem>>, %arg2: memref<8x72xbf16, #tpu.memory_space<vmem>>, %arg3: memref<8x72xbf16, #tpu.memory_space<vmem>>, %arg4: memref<8x72xbf16, #tpu.memory_space<vmem>>, %arg5: memref<1x9xbf16, #tpu.memory_space<vmem>>, %arg6: memref<8x9xf32, #tpu.memory_space<vmem>>, %arg7: memref<1x512xf32, #tpu.memory_space<vmem>>) attributes {dimension_semantics = [], scalar_prefetch = 0 : i64, scratch_operands = 0 : i64, tpu.core_type = #tpu.core_type<tc>} {
    %c0 = arith.constant 0 : index
    %c0_0 = arith.constant 0 : index
    %0 = vector.load %arg1[%c0, %c0_0] : memref<72x512xf32, #tpu.memory_space<vmem>>, vector<72x512xf32>
    %c0_1 = arith.constant 0 : index
    %c0_2 = arith.constant 0 : index
    %1 = vector.load %arg6[%c0_1, %c0_2] : memref<8x9xf32, #tpu.memory_space<vmem>>, vector<8x9xf32>
    %2 = vector.extract_strided_slice %1 {offsets = [0, 0], sizes = [8, 1], strides = [1, 1]} : vector<8x9xf32> to vector<8x1xf32>
    %3 = vector.extract_strided_slice %1 {offsets = [0, 1], sizes = [8, 1], strides = [1, 1]} : vector<8x9xf32> to vector<8x1xf32>
    %4 = vector.extract_strided_slice %1 {offsets = [0, 2], sizes = [8, 1], strides = [1, 1]} : vector<8x9xf32> to vector<8x1xf32>
    %5 = vector.extract_strided_slice %1 {offsets = [0, 3], sizes = [8, 1], strides = [1, 1]} : vector<8x9xf32> to vector<8x1xf32>
    %6 = vector.extract_strided_slice %1 {offsets = [0, 4], sizes = [8, 1], strides = [1, 1]} : vector<8x9xf32> to vector<8x1xf32>
    %7 = vector.extract_strided_slice %1 {offsets = [0, 5], sizes = [8, 1], strides = [1, 1]} : vector<8x9xf32> to vector<8x1xf32>
    %8 = vector.extract_strided_slice %1 {offsets = [0, 6], sizes = [8, 1], strides = [1, 1]} : vector<8x9xf32> to vector<8x1xf32>
    %9 = vector.extract_strided_slice %1 {offsets = [0, 7], sizes = [8, 1], strides = [1, 1]} : vector<8x9xf32> to vector<8x1xf32>
    %10 = vector.extract_strided_slice %1 {offsets = [0, 8], sizes = [8, 1], strides = [1, 1]} : vector<8x9xf32> to vector<8x1xf32>
    %c0_3 = arith.constant 0 : index
    %c0_4 = arith.constant 0 : index
    %11 = vector.load %arg0[%c0_3, %c0_4] : memref<8x512xf32, #tpu.memory_space<vmem>>, vector<8x512xf32>
    %c17_i32 = arith.constant 17 : i32
    %12 = tpu.dynamic_rotate %11 by %c17_i32 dim 1 : vector<8x512xf32>, i32 -> vector<8x512xf32>
    %c16_i32 = arith.constant 16 : i32
    %13 = tpu.dynamic_rotate %11 by %c16_i32 dim 1 : vector<8x512xf32>, i32 -> vector<8x512xf32>
    %c15_i32 = arith.constant 15 : i32
    %14 = tpu.dynamic_rotate %11 by %c15_i32 dim 1 : vector<8x512xf32>, i32 -> vector<8x512xf32>
    %c1_i32 = arith.constant 1 : i32
    %15 = tpu.dynamic_rotate %11 by %c1_i32 dim 1 : vector<8x512xf32>, i32 -> vector<8x512xf32>
    %c511_i32 = arith.constant 511 : i32
    %16 = tpu.dynamic_rotate %11 by %c511_i32 dim 1 : vector<8x512xf32>, i32 -> vector<8x512xf32>
    %c497_i32 = arith.constant 497 : i32
    %17 = tpu.dynamic_rotate %11 by %c497_i32 dim 1 : vector<8x512xf32>, i32 -> vector<8x512xf32>
    %c496_i32 = arith.constant 496 : i32
    %18 = tpu.dynamic_rotate %11 by %c496_i32 dim 1 : vector<8x512xf32>, i32 -> vector<8x512xf32>
    %c495_i32 = arith.constant 495 : i32
    %19 = tpu.dynamic_rotate %11 by %c495_i32 dim 1 : vector<8x512xf32>, i32 -> vector<8x512xf32>
    %20 = tpu.concatenate %12, %13, %14, %15, %11, %16, %17, %18, %19 in 0 : vector<8x512xf32>, vector<8x512xf32>, vector<8x512xf32>, vector<8x512xf32>, vector<8x512xf32>, vector<8x512xf32>, vector<8x512xf32>, vector<8x512xf32>, vector<8x512xf32> -> vector<72x512xf32>
    %21 = arith.mulf %20, %0 : vector<72x512xf32>
    %22 = arith.truncf %21 : vector<72x512xf32> to vector<72x512xbf16>
    %c0_5 = arith.constant 0 : index
    %c0_6 = arith.constant 0 : index
    %23 = vector.load %arg2[%c0_5, %c0_6] : memref<8x72xbf16, #tpu.memory_space<vmem>>, vector<8x72xbf16>
    %cst = arith.constant dense<0.000000e+00> : vector<8x512xf32>
    %24 = tpu.matmul %23, %22, %cst {dimension_numbers = #tpu.dot_dimension_numbers<[1], [0], [0], [1], [0, 0, 1, 1], [], []>} : vector<8x72xbf16>, vector<72x512xbf16>, vector<8x512xf32> -> vector<8x512xf32>
    %25 = vector.broadcast %2 : vector<8x1xf32> to vector<8x512xf32>
    %26 = arith.addf %24, %25 : vector<8x512xf32>
    %27 = vector.extract_strided_slice %26 {offsets = [0, 0], sizes = [8, 256], strides = [1, 1]} : vector<8x512xf32> to vector<8x256xf32>
    %cst_7 = arith.constant dense<0.000000e+00> : vector<8xf32>
    %28 = vector.multi_reduction <add>, %27, %cst_7 [1] : vector<8x256xf32> to vector<8xf32>
    %29 = vector.shape_cast %28 : vector<8xf32> to vector<8x1xf32>
    %30 = arith.mulf %27, %27 : vector<8x256xf32>
    %cst_8 = arith.constant dense<0.000000e+00> : vector<8xf32>
    %31 = vector.multi_reduction <add>, %30, %cst_8 [1] : vector<8x256xf32> to vector<8xf32>
    %32 = vector.shape_cast %31 : vector<8xf32> to vector<8x1xf32>
    %cst_9 = arith.constant 3.906250e-03 : f32
    %33 = vector.broadcast %cst_9 : f32 to vector<8x1xf32>
    %34 = arith.mulf %29, %33 : vector<8x1xf32>
    %cst_10 = arith.constant 3.906250e-03 : f32
    %35 = vector.broadcast %cst_10 : f32 to vector<8x1xf32>
    %36 = arith.mulf %32, %35 : vector<8x1xf32>
    %37 = arith.mulf %34, %34 : vector<8x1xf32>
    %38 = arith.subf %36, %37 : vector<8x1xf32>
    %cst_11 = arith.constant 0.000000e+00 : f32
    %39 = vector.broadcast %cst_11 : f32 to vector<8x1xf32>
    %40 = arith.maximumf %38, %39 : vector<8x1xf32>
    %cst_12 = arith.constant 9.99999974E-6 : f32
    %41 = vector.broadcast %cst_12 : f32 to vector<8x1xf32>
    %42 = arith.addf %40, %41 : vector<8x1xf32>
    %43 = math.rsqrt %42 : vector<8x1xf32>
    %44 = vector.broadcast %34 : vector<8x1xf32> to vector<8x256xf32>
    %45 = arith.subf %27, %44 : vector<8x256xf32>
    %46 = vector.broadcast %43 : vector<8x1xf32> to vector<8x256xf32>
    %47 = arith.mulf %45, %46 : vector<8x256xf32>
    %48 = vector.extract_strided_slice %26 {offsets = [0, 256], sizes = [8, 256], strides = [1, 1]} : vector<8x512xf32> to vector<8x256xf32>
    %cst_13 = arith.constant dense<0.000000e+00> : vector<8xf32>
    %49 = vector.multi_reduction <add>, %48, %cst_13 [1] : vector<8x256xf32> to vector<8xf32>
    %50 = vector.shape_cast %49 : vector<8xf32> to vector<8x1xf32>
    %51 = arith.mulf %48, %48 : vector<8x256xf32>
    %cst_14 = arith.constant dense<0.000000e+00> : vector<8xf32>
    %52 = vector.multi_reduction <add>, %51, %cst_14 [1] : vector<8x256xf32> to vector<8xf32>
    %53 = vector.shape_cast %52 : vector<8xf32> to vector<8x1xf32>
    %cst_15 = arith.constant 3.906250e-03 : f32
    %54 = vector.broadcast %cst_15 : f32 to vector<8x1xf32>
    %55 = arith.mulf %50, %54 : vector<8x1xf32>
    %cst_16 = arith.constant 3.906250e-03 : f32
    %56 = vector.broadcast %cst_16 : f32 to vector<8x1xf32>
    %57 = arith.mulf %53, %56 : vector<8x1xf32>
    %58 = arith.mulf %55, %55 : vector<8x1xf32>
    %59 = arith.subf %57, %58 : vector<8x1xf32>
    %cst_17 = arith.constant 0.000000e+00 : f32
    %60 = vector.broadcast %cst_17 : f32 to vector<8x1xf32>
    %61 = arith.maximumf %59, %60 : vector<8x1xf32>
    %cst_18 = arith.constant 9.99999974E-6 : f32
    %62 = vector.broadcast %cst_18 : f32 to vector<8x1xf32>
    %63 = arith.addf %61, %62 : vector<8x1xf32>
    %64 = math.rsqrt %63 : vector<8x1xf32>
    %65 = vector.broadcast %55 : vector<8x1xf32> to vector<8x256xf32>
    %66 = arith.subf %48, %65 : vector<8x256xf32>
    %67 = vector.broadcast %64 : vector<8x1xf32> to vector<8x256xf32>
    %68 = arith.mulf %66, %67 : vector<8x256xf32>
    %69 = tpu.concatenate %47, %68 in 1 : vector<8x256xf32>, vector<8x256xf32> -> vector<8x512xf32>
    %70 = vector.broadcast %3 : vector<8x1xf32> to vector<8x512xf32>
    %71 = arith.mulf %69, %70 : vector<8x512xf32>
    %72 = vector.broadcast %4 : vector<8x1xf32> to vector<8x512xf32>
    %73 = arith.addf %71, %72 : vector<8x512xf32>
    %cst_19 = arith.constant 0.000000e+00 : f32
    %74 = vector.broadcast %cst_19 : f32 to vector<8x512xf32>
    %75 = arith.maximumf %73, %74 : vector<8x512xf32>
    %c17_i32_20 = arith.constant 17 : i32
    %76 = tpu.dynamic_rotate %75 by %c17_i32_20 dim 1 : vector<8x512xf32>, i32 -> vector<8x512xf32>
    %c16_i32_21 = arith.constant 16 : i32
    %77 = tpu.dynamic_rotate %75 by %c16_i32_21 dim 1 : vector<8x512xf32>, i32 -> vector<8x512xf32>
    %c15_i32_22 = arith.constant 15 : i32
    %78 = tpu.dynamic_rotate %75 by %c15_i32_22 dim 1 : vector<8x512xf32>, i32 -> vector<8x512xf32>
    %c1_i32_23 = arith.constant 1 : i32
    %79 = tpu.dynamic_rotate %75 by %c1_i32_23 dim 1 : vector<8x512xf32>, i32 -> vector<8x512xf32>
    %c511_i32_24 = arith.constant 511 : i32
    %80 = tpu.dynamic_rotate %75 by %c511_i32_24 dim 1 : vector<8x512xf32>, i32 -> vector<8x512xf32>
    %c497_i32_25 = arith.constant 497 : i32
    %81 = tpu.dynamic_rotate %75 by %c497_i32_25 dim 1 : vector<8x512xf32>, i32 -> vector<8x512xf32>
    %c496_i32_26 = arith.constant 496 : i32
    %82 = tpu.dynamic_rotate %75 by %c496_i32_26 dim 1 : vector<8x512xf32>, i32 -> vector<8x512xf32>
    %c495_i32_27 = arith.constant 495 : i32
    %83 = tpu.dynamic_rotate %75 by %c495_i32_27 dim 1 : vector<8x512xf32>, i32 -> vector<8x512xf32>
    %84 = tpu.concatenate %76, %77, %78, %79, %75, %80, %81, %82, %83 in 0 : vector<8x512xf32>, vector<8x512xf32>, vector<8x512xf32>, vector<8x512xf32>, vector<8x512xf32>, vector<8x512xf32>, vector<8x512xf32>, vector<8x512xf32>, vector<8x512xf32> -> vector<72x512xf32>
    %85 = arith.mulf %84, %0 : vector<72x512xf32>
    %86 = arith.truncf %85 : vector<72x512xf32> to vector<72x512xbf16>
    %c0_28 = arith.constant 0 : index
    %c0_29 = arith.constant 0 : index
    %87 = vector.load %arg3[%c0_28, %c0_29] : memref<8x72xbf16, #tpu.memory_space<vmem>>, vector<8x72xbf16>
    %cst_30 = arith.constant dense<0.000000e+00> : vector<8x512xf32>
    %88 = tpu.matmul %87, %86, %cst_30 {dimension_numbers = #tpu.dot_dimension_numbers<[1], [0], [0], [1], [0, 0, 1, 1], [], []>} : vector<8x72xbf16>, vector<72x512xbf16>, vector<8x512xf32> -> vector<8x512xf32>
    %89 = vector.broadcast %5 : vector<8x1xf32> to vector<8x512xf32>
    %90 = arith.addf %88, %89 : vector<8x512xf32>
    %91 = vector.extract_strided_slice %90 {offsets = [0, 0], sizes = [8, 256], strides = [1, 1]} : vector<8x512xf32> to vector<8x256xf32>
    %cst_31 = arith.constant dense<0.000000e+00> : vector<8xf32>
    %92 = vector.multi_reduction <add>, %91, %cst_31 [1] : vector<8x256xf32> to vector<8xf32>
    %93 = vector.shape_cast %92 : vector<8xf32> to vector<8x1xf32>
    %94 = arith.mulf %91, %91 : vector<8x256xf32>
    %cst_32 = arith.constant dense<0.000000e+00> : vector<8xf32>
    %95 = vector.multi_reduction <add>, %94, %cst_32 [1] : vector<8x256xf32> to vector<8xf32>
    %96 = vector.shape_cast %95 : vector<8xf32> to vector<8x1xf32>
    %cst_33 = arith.constant 3.906250e-03 : f32
    %97 = vector.broadcast %cst_33 : f32 to vector<8x1xf32>
    %98 = arith.mulf %93, %97 : vector<8x1xf32>
    %cst_34 = arith.constant 3.906250e-03 : f32
    %99 = vector.broadcast %cst_34 : f32 to vector<8x1xf32>
    %100 = arith.mulf %96, %99 : vector<8x1xf32>
    %101 = arith.mulf %98, %98 : vector<8x1xf32>
    %102 = arith.subf %100, %101 : vector<8x1xf32>
    %cst_35 = arith.constant 0.000000e+00 : f32
    %103 = vector.broadcast %cst_35 : f32 to vector<8x1xf32>
    %104 = arith.maximumf %102, %103 : vector<8x1xf32>
    %cst_36 = arith.constant 9.99999974E-6 : f32
    %105 = vector.broadcast %cst_36 : f32 to vector<8x1xf32>
    %106 = arith.addf %104, %105 : vector<8x1xf32>
    %107 = math.rsqrt %106 : vector<8x1xf32>
    %108 = vector.broadcast %98 : vector<8x1xf32> to vector<8x256xf32>
    %109 = arith.subf %91, %108 : vector<8x256xf32>
    %110 = vector.broadcast %107 : vector<8x1xf32> to vector<8x256xf32>
    %111 = arith.mulf %109, %110 : vector<8x256xf32>
    %112 = vector.extract_strided_slice %90 {offsets = [0, 256], sizes = [8, 256], strides = [1, 1]} : vector<8x512xf32> to vector<8x256xf32>
    %cst_37 = arith.constant dense<0.000000e+00> : vector<8xf32>
    %113 = vector.multi_reduction <add>, %112, %cst_37 [1] : vector<8x256xf32> to vector<8xf32>
    %114 = vector.shape_cast %113 : vector<8xf32> to vector<8x1xf32>
    %115 = arith.mulf %112, %112 : vector<8x256xf32>
    %cst_38 = arith.constant dense<0.000000e+00> : vector<8xf32>
    %116 = vector.multi_reduction <add>, %115, %cst_38 [1] : vector<8x256xf32> to vector<8xf32>
    %117 = vector.shape_cast %116 : vector<8xf32> to vector<8x1xf32>
    %cst_39 = arith.constant 3.906250e-03 : f32
    %118 = vector.broadcast %cst_39 : f32 to vector<8x1xf32>
    %119 = arith.mulf %114, %118 : vector<8x1xf32>
    %cst_40 = arith.constant 3.906250e-03 : f32
    %120 = vector.broadcast %cst_40 : f32 to vector<8x1xf32>
    %121 = arith.mulf %117, %120 : vector<8x1xf32>
    %122 = arith.mulf %119, %119 : vector<8x1xf32>
    %123 = arith.subf %121, %122 : vector<8x1xf32>
    %cst_41 = arith.constant 0.000000e+00 : f32
    %124 = vector.broadcast %cst_41 : f32 to vector<8x1xf32>
    %125 = arith.maximumf %123, %124 : vector<8x1xf32>
    %cst_42 = arith.constant 9.99999974E-6 : f32
    %126 = vector.broadcast %cst_42 : f32 to vector<8x1xf32>
    %127 = arith.addf %125, %126 : vector<8x1xf32>
    %128 = math.rsqrt %127 : vector<8x1xf32>
    %129 = vector.broadcast %119 : vector<8x1xf32> to vector<8x256xf32>
    %130 = arith.subf %112, %129 : vector<8x256xf32>
    %131 = vector.broadcast %128 : vector<8x1xf32> to vector<8x256xf32>
    %132 = arith.mulf %130, %131 : vector<8x256xf32>
    %133 = tpu.concatenate %111, %132 in 1 : vector<8x256xf32>, vector<8x256xf32> -> vector<8x512xf32>
    %134 = vector.broadcast %6 : vector<8x1xf32> to vector<8x512xf32>
    %135 = arith.mulf %133, %134 : vector<8x512xf32>
    %136 = vector.broadcast %7 : vector<8x1xf32> to vector<8x512xf32>
    %137 = arith.addf %135, %136 : vector<8x512xf32>
    %cst_43 = arith.constant 0.000000e+00 : f32
    %138 = vector.broadcast %cst_43 : f32 to vector<8x512xf32>
    %139 = arith.maximumf %137, %138 : vector<8x512xf32>
    %c17_i32_44 = arith.constant 17 : i32
    %140 = tpu.dynamic_rotate %139 by %c17_i32_44 dim 1 : vector<8x512xf32>, i32 -> vector<8x512xf32>
    %c16_i32_45 = arith.constant 16 : i32
    %141 = tpu.dynamic_rotate %139 by %c16_i32_45 dim 1 : vector<8x512xf32>, i32 -> vector<8x512xf32>
    %c15_i32_46 = arith.constant 15 : i32
    %142 = tpu.dynamic_rotate %139 by %c15_i32_46 dim 1 : vector<8x512xf32>, i32 -> vector<8x512xf32>
    %c1_i32_47 = arith.constant 1 : i32
    %143 = tpu.dynamic_rotate %139 by %c1_i32_47 dim 1 : vector<8x512xf32>, i32 -> vector<8x512xf32>
    %c511_i32_48 = arith.constant 511 : i32
    %144 = tpu.dynamic_rotate %139 by %c511_i32_48 dim 1 : vector<8x512xf32>, i32 -> vector<8x512xf32>
    %c497_i32_49 = arith.constant 497 : i32
    %145 = tpu.dynamic_rotate %139 by %c497_i32_49 dim 1 : vector<8x512xf32>, i32 -> vector<8x512xf32>
    %c496_i32_50 = arith.constant 496 : i32
    %146 = tpu.dynamic_rotate %139 by %c496_i32_50 dim 1 : vector<8x512xf32>, i32 -> vector<8x512xf32>
    %c495_i32_51 = arith.constant 495 : i32
    %147 = tpu.dynamic_rotate %139 by %c495_i32_51 dim 1 : vector<8x512xf32>, i32 -> vector<8x512xf32>
    %148 = tpu.concatenate %140, %141, %142, %143, %139, %144, %145, %146, %147 in 0 : vector<8x512xf32>, vector<8x512xf32>, vector<8x512xf32>, vector<8x512xf32>, vector<8x512xf32>, vector<8x512xf32>, vector<8x512xf32>, vector<8x512xf32>, vector<8x512xf32> -> vector<72x512xf32>
    %149 = arith.mulf %148, %0 : vector<72x512xf32>
    %150 = arith.truncf %149 : vector<72x512xf32> to vector<72x512xbf16>
    %c0_52 = arith.constant 0 : index
    %c0_53 = arith.constant 0 : index
    %151 = vector.load %arg4[%c0_52, %c0_53] : memref<8x72xbf16, #tpu.memory_space<vmem>>, vector<8x72xbf16>
    %cst_54 = arith.constant dense<0.000000e+00> : vector<8x512xf32>
    %152 = tpu.matmul %151, %150, %cst_54 {dimension_numbers = #tpu.dot_dimension_numbers<[1], [0], [0], [1], [0, 0, 1, 1], [], []>} : vector<8x72xbf16>, vector<72x512xbf16>, vector<8x512xf32> -> vector<8x512xf32>
    %153 = vector.broadcast %8 : vector<8x1xf32> to vector<8x512xf32>
    %154 = arith.addf %152, %153 : vector<8x512xf32>
    %155 = arith.addf %154, %26 : vector<8x512xf32>
    %156 = vector.extract_strided_slice %155 {offsets = [0, 0], sizes = [8, 256], strides = [1, 1]} : vector<8x512xf32> to vector<8x256xf32>
    %cst_55 = arith.constant dense<0.000000e+00> : vector<8xf32>
    %157 = vector.multi_reduction <add>, %156, %cst_55 [1] : vector<8x256xf32> to vector<8xf32>
    %158 = vector.shape_cast %157 : vector<8xf32> to vector<8x1xf32>
    %159 = arith.mulf %156, %156 : vector<8x256xf32>
    %cst_56 = arith.constant dense<0.000000e+00> : vector<8xf32>
    %160 = vector.multi_reduction <add>, %159, %cst_56 [1] : vector<8x256xf32> to vector<8xf32>
    %161 = vector.shape_cast %160 : vector<8xf32> to vector<8x1xf32>
    %cst_57 = arith.constant 3.906250e-03 : f32
    %162 = vector.broadcast %cst_57 : f32 to vector<8x1xf32>
    %163 = arith.mulf %158, %162 : vector<8x1xf32>
    %cst_58 = arith.constant 3.906250e-03 : f32
    %164 = vector.broadcast %cst_58 : f32 to vector<8x1xf32>
    %165 = arith.mulf %161, %164 : vector<8x1xf32>
    %166 = arith.mulf %163, %163 : vector<8x1xf32>
    %167 = arith.subf %165, %166 : vector<8x1xf32>
    %cst_59 = arith.constant 0.000000e+00 : f32
    %168 = vector.broadcast %cst_59 : f32 to vector<8x1xf32>
    %169 = arith.maximumf %167, %168 : vector<8x1xf32>
    %cst_60 = arith.constant 9.99999974E-6 : f32
    %170 = vector.broadcast %cst_60 : f32 to vector<8x1xf32>
    %171 = arith.addf %169, %170 : vector<8x1xf32>
    %172 = math.rsqrt %171 : vector<8x1xf32>
    %173 = vector.broadcast %163 : vector<8x1xf32> to vector<8x256xf32>
    %174 = arith.subf %156, %173 : vector<8x256xf32>
    %175 = vector.broadcast %172 : vector<8x1xf32> to vector<8x256xf32>
    %176 = arith.mulf %174, %175 : vector<8x256xf32>
    %177 = vector.extract_strided_slice %155 {offsets = [0, 256], sizes = [8, 256], strides = [1, 1]} : vector<8x512xf32> to vector<8x256xf32>
    %cst_61 = arith.constant dense<0.000000e+00> : vector<8xf32>
    %178 = vector.multi_reduction <add>, %177, %cst_61 [1] : vector<8x256xf32> to vector<8xf32>
    %179 = vector.shape_cast %178 : vector<8xf32> to vector<8x1xf32>
    %180 = arith.mulf %177, %177 : vector<8x256xf32>
    %cst_62 = arith.constant dense<0.000000e+00> : vector<8xf32>
    %181 = vector.multi_reduction <add>, %180, %cst_62 [1] : vector<8x256xf32> to vector<8xf32>
    %182 = vector.shape_cast %181 : vector<8xf32> to vector<8x1xf32>
    %cst_63 = arith.constant 3.906250e-03 : f32
    %183 = vector.broadcast %cst_63 : f32 to vector<8x1xf32>
    %184 = arith.mulf %179, %183 : vector<8x1xf32>
    %cst_64 = arith.constant 3.906250e-03 : f32
    %185 = vector.broadcast %cst_64 : f32 to vector<8x1xf32>
    %186 = arith.mulf %182, %185 : vector<8x1xf32>
    %187 = arith.mulf %184, %184 : vector<8x1xf32>
    %188 = arith.subf %186, %187 : vector<8x1xf32>
    %cst_65 = arith.constant 0.000000e+00 : f32
    %189 = vector.broadcast %cst_65 : f32 to vector<8x1xf32>
    %190 = arith.maximumf %188, %189 : vector<8x1xf32>
    %cst_66 = arith.constant 9.99999974E-6 : f32
    %191 = vector.broadcast %cst_66 : f32 to vector<8x1xf32>
    %192 = arith.addf %190, %191 : vector<8x1xf32>
    %193 = math.rsqrt %192 : vector<8x1xf32>
    %194 = vector.broadcast %184 : vector<8x1xf32> to vector<8x256xf32>
    %195 = arith.subf %177, %194 : vector<8x256xf32>
    %196 = vector.broadcast %193 : vector<8x1xf32> to vector<8x256xf32>
    %197 = arith.mulf %195, %196 : vector<8x256xf32>
    %198 = tpu.concatenate %176, %197 in 1 : vector<8x256xf32>, vector<8x256xf32> -> vector<8x512xf32>
    %199 = vector.broadcast %9 : vector<8x1xf32> to vector<8x512xf32>
    %200 = arith.mulf %198, %199 : vector<8x512xf32>
    %201 = vector.broadcast %10 : vector<8x1xf32> to vector<8x512xf32>
    %202 = arith.addf %200, %201 : vector<8x512xf32>
    %cst_67 = arith.constant 0.000000e+00 : f32
    %203 = vector.broadcast %cst_67 : f32 to vector<8x512xf32>
    %204 = arith.maximumf %202, %203 : vector<8x512xf32>
    %cst_68 = arith.constant 1.000000e+00 : f32
    %205 = vector.broadcast %cst_68 : f32 to vector<1x512xf32>
    %206 = tpu.concatenate %204, %205 in 0 : vector<8x512xf32>, vector<1x512xf32> -> vector<9x512xf32>
    %c0_69 = arith.constant 0 : index
    %c0_70 = arith.constant 0 : index
    %207 = vector.load %arg5[%c0_69, %c0_70] : memref<1x9xbf16, #tpu.memory_space<vmem>>, vector<1x9xbf16>
    %208 = arith.truncf %206 : vector<9x512xf32> to vector<9x512xbf16>
    %cst_71 = arith.constant dense<0.000000e+00> : vector<1x512xf32>
    %209 = tpu.matmul %207, %208, %cst_71 {dimension_numbers = #tpu.dot_dimension_numbers<[1], [0], [0], [1], [0, 0, 1, 1], [], []>} : vector<1x9xbf16>, vector<9x512xbf16>, vector<1x512xf32> -> vector<1x512xf32>
    %c0_72 = arith.constant 0 : index
    %c0_73 = arith.constant 0 : index
    %210 = vector.load %arg7[%c0_72, %c0_73] : memref<1x512xf32, #tpu.memory_space<vmem>>, vector<1x512xf32>
    tpu.vector_store %arg7[%c0_72, %c0_73], %209 {strides = array<i32>} : memref<1x512xf32, #tpu.memory_space<vmem>>, vector<1x512xf32>,
    return
  }
}

</mosaic_0001>

<llo_original>
// kernel: sts2d_forward.1
$region0: #{sts2d_forward.1}
  #allocation0 [shape = 'u32[]', space=smem, size = 0x4, offset = 0x4, fixed_abs, tag = 'smem constant byte address 0x4 - core index']
  #allocation1 [shape = 'u32[72,128]{1,0:T(1,128)}', space=vmem, size = 0x9000, scoped, tag = 'internal scratch']
  %s0 = inlined_call_operand.vmem [shape: f32[8,512], index: 0, kind: input, shape index: {}]
  %s1 = inlined_call_operand.vmem [shape: f32[72,512], index: 1, kind: input, shape index: {}]
  %s2 = inlined_call_operand.vmem [shape: bf16[8,72], index: 2, kind: input, shape index: {}]
  %s3 = inlined_call_operand.vmem [shape: bf16[8,72], index: 3, kind: input, shape index: {}]
  %s4 = inlined_call_operand.vmem [shape: bf16[8,72], index: 4, kind: input, shape index: {}]
  %s5 = inlined_call_operand.vmem [shape: bf16[1,9], index: 5, kind: input, shape index: {}]
  %s6 = inlined_call_operand.vmem [shape: f32[8,9], index: 6, kind: input, shape index: {}]
  %s7 = inlined_call_operand.vmem [shape: f32[1,512], index: 7, kind: output, shape index: {}]
  %s8 = sld [smem:[#allocation0]]
  $region38: #{sts2d_forward.1} parent=0
    _
  %s10 = ssub.s32 1, %s8
  %s11 = scalar_select 0, %s10, %s8
  // Predicated region
  $region2: #{sts2d_forward.1} parent=0 // pred_check
    _
  $region3: #{sts2d_forward.1} parent=0 // pred_check_branch
    %13 = sbr.rel (0) target = $region5
  $region4: #{sts2d_forward.1} parent=0 // pred_region
    _
  $region5: #{sts2d_forward.1} parent=0 // pred_fallthru
    _
  // Predicated region
  $region6: #{sts2d_forward.1} parent=0 // pred_check
    _
  $region7: #{sts2d_forward.1} parent=0 // pred_check_branch
    %15 = sbr.rel (0) target = $region9
  $region8: #{sts2d_forward.1} parent=0 // pred_region
    _
  $region9: #{sts2d_forward.1} parent=0 // pred_fallthru
    _
  // Predicated region
  $region10: #{sts2d_forward.1} parent=0 // pred_check
    _
  $region11: #{sts2d_forward.1} parent=0 // pred_check_branch
    %17 = sbr.rel (0) target = $region13
  $region12: #{sts2d_forward.1} parent=0 // pred_region
    _
  $region13: #{sts2d_forward.1} parent=0 // pred_fallthru
    _
  // Predicated region
  $region14: #{sts2d_forward.1} parent=0 // pred_check
    _
  $region15: #{sts2d_forward.1} parent=0 // pred_check_branch
    %19 = sbr.rel (0) target = $region17
  $region16: #{sts2d_forward.1} parent=0 // pred_region
    _
  $region17: #{sts2d_forward.1} parent=0 // pred_fallthru
    _
  // Predicated region
  $region18: #{sts2d_forward.1} parent=0 // pred_check
    _
  $region19: #{sts2d_forward.1} parent=0 // pred_check_branch
    %21 = sbr.rel (0) target = $region21
  $region20: #{sts2d_forward.1} parent=0 // pred_region
    _
  $region21: #{sts2d_forward.1} parent=0 // pred_fallthru
    _
  // Predicated region
  $region22: #{sts2d_forward.1} parent=0 // pred_check
    _
  $region23: #{sts2d_forward.1} parent=0 // pred_check_branch
    %23 = sbr.rel (0) target = $region25
  $region24: #{sts2d_forward.1} parent=0 // pred_region
    _
  $region25: #{sts2d_forward.1} parent=0 // pred_fallthru
    _
  // Predicated region
  $region26: #{sts2d_forward.1} parent=0 // pred_check
    _
  $region27: #{sts2d_forward.1} parent=0 // pred_check_branch
    %25 = sbr.rel (0) target = $region29
  $region28: #{sts2d_forward.1} parent=0 // pred_region
    _
  $region29: #{sts2d_forward.1} parent=0 // pred_fallthru
    _
  %v27 = vld [vmem:[%s1] sm:$0xff]
  %v28 = vld [vmem:[%s1 + $0x8] sm:$0xff]
  %v29 = vld [vmem:[%s1 + $0x10] sm:$0xff]
  %v30 = vld [vmem:[%s1 + $0x18] sm:$0xff]
  %v31 = vld [vmem:[%s1 + $0x20] sm:$0xff]
  %v32 = vld [vmem:[%s1 + $0x28] sm:$0xff]
  %v33 = vld [vmem:[%s1 + $0x30] sm:$0xff]
  %v34 = vld [vmem:[%s1 + $0x38] sm:$0xff]
  %v35 = vld [vmem:[%s1 + $0x40] sm:$0xff]
  %v36 = vld [vmem:[%s1 + $0x48] sm:$0xff]
  %v37 = vld [vmem:[%s1 + $0x50] sm:$0xff]
  %v38 = vld [vmem:[%s1 + $0x58] sm:$0xff]
  %v39 = vld [vmem:[%s1 + $0x60] sm:$0xff]
  %v40 = vld [vmem:[%s1 + $0x68] sm:$0xff]
  %v41 = vld [vmem:[%s1 + $0x70] sm:$0xff]
  %v42 = vld [vmem:[%s1 + $0x78] sm:$0xff]
  %v43 = vld [vmem:[%s1 + $0x80] sm:$0xff]
  %v44 = vld [vmem:[%s1 + $0x88] sm:$0xff]
  %v45 = vld [vmem:[%s1 + $0x90] sm:$0xff]
  %v46 = vld [vmem:[%s1 + $0x98] sm:$0xff]
  %v47 = vld [vmem:[%s1 + $0xa0] sm:$0xff]
  %v48 = vld [vmem:[%s1 + $0xa8] sm:$0xff]
  %v49 = vld [vmem:[%s1 + $0xb0] sm:$0xff]
  %v50 = vld [vmem:[%s1 + $0xb8] sm:$0xff]
  %v51 = vld [vmem:[%s1 + $0xc0] sm:$0xff]
  %v52 = vld [vmem:[%s1 + $0xc8] sm:$0xff]
  %v53 = vld [vmem:[%s1 + $0xd0] sm:$0xff]
  %v54 = vld [vmem:[%s1 + $0xd8] sm:$0xff]
  %v55 = vld [vmem:[%s1 + $0xe0] sm:$0xff]
  %v56 = vld [vmem:[%s1 + $0xe8] sm:$0xff]
  %v57 = vld [vmem:[%s1 + $0xf0] sm:$0xff]
  %v58 = vld [vmem:[%s1 + $0xf8] sm:$0xff]
  %v59 = vld [vmem:[%s1 + $0x100] sm:$0xff]
  %v60 = vld [vmem:[%s1 + $0x108] sm:$0xff]
  %v61 = vld [vmem:[%s1 + $0x110] sm:$0xff]
  %v62 = vld [vmem:[%s1 + $0x118] sm:$0xff]
  %v63 = vld [vmem:[%s6] sm:$0xff]
  %v64 = vld [vmem:[%s0] sm:$0xff]
  %v65 = vld [vmem:[%s0 + $0x8] sm:$0xff]
  %v66 = vld [vmem:[%s0 + $0x10] sm:$0xff]
  %v67 = vld [vmem:[%s0 + $0x18] sm:$0xff]
  %68 = vrot.lane.b32.xlu0 %v64, 17
  %v69 = vpop.permute.xlu0 %68
  %70 = vrot.lane.b32.xlu0 %v65, 17
  %v71 = vpop.permute.xlu0 %70
  %72 = vrot.lane.b32.xlu0 %v66, 17
  %v73 = vpop.permute.xlu0 %72
  %74 = vrot.lane.b32.xlu0 %v67, 17
  %v75 = vpop.permute.xlu0 %74
  %v76 = vlaneseq
  %v77 = vand.u32 %v76, 127
  %vm78 = vcmp.lt.s32.totalorder %v77, 17
  %v79 = vsel %vm78, %v73, %v75
  %v80 = vsel %vm78, %v71, %v73
  %v81 = vsel %vm78, %v69, %v71
  %v82 = vsel %vm78, %v75, %v69
  %83 = vrot.lane.b32.xlu0 %v64, 16
  %v84 = vpop.permute.xlu0 %83
  %85 = vrot.lane.b32.xlu0 %v65, 16
  %v86 = vpop.permute.xlu0 %85
  %87 = vrot.lane.b32.xlu0 %v66, 16
  %v88 = vpop.permute.xlu0 %87
  %89 = vrot.lane.b32.xlu0 %v67, 16
  %v90 = vpop.permute.xlu0 %89
  %vm91 = vcmp.lt.s32.totalorder %v77, 16
  %v92 = vsel %vm91, %v88, %v90
  %v93 = vsel %vm91, %v86, %v88
  %v94 = vsel %vm91, %v84, %v86
  %v95 = vsel %vm91, %v90, %v84
  %96 = vrot.lane.b32.xlu0 %v64, 15
  %v97 = vpop.permute.xlu0 %96
  %98 = vrot.lane.b32.xlu0 %v65, 15
  %v99 = vpop.permute.xlu0 %98
  %100 = vrot.lane.b32.xlu0 %v66, 15
  %v101 = vpop.permute.xlu0 %100
  %102 = vrot.lane.b32.xlu0 %v67, 15
  %v103 = vpop.permute.xlu0 %102
  %vm104 = vcmp.lt.s32.totalorder %v77, 15
  %v105 = vsel %vm104, %v101, %v103
  %v106 = vsel %vm104, %v99, %v101
  %v107 = vsel %vm104, %v97, %v99
  %v108 = vsel %vm104, %v103, %v97
  %109 = vrot.lane.b32.xlu0 %v64, 1
  %v110 = vpop.permute.xlu0 %109
  %111 = vrot.lane.b32.xlu0 %v65, 1
  %v112 = vpop.permute.xlu0 %111
  %113 = vrot.lane.b32.xlu0 %v66, 1
  %v114 = vpop.permute.xlu0 %113
  %115 = vrot.lane.b32.xlu0 %v67, 1
  %v116 = vpop.permute.xlu0 %115
  %vm117 = vcmp.lt.s32.totalorder %v77, 1
  %v118 = vsel %vm117, %v114, %v116
  %v119 = vsel %vm117, %v112, %v114
  %v120 = vsel %vm117, %v110, %v112
  %v121 = vsel %vm117, %v116, %v110
  %122 = vrot.lane.b32.xlu0 %v64, 127
  %v123 = vpop.permute.xlu0 %122
  %124 = vrot.lane.b32.xlu0 %v65, 127
  %v125 = vpop.permute.xlu0 %124
  %126 = vrot.lane.b32.xlu0 %v66, 127
  %v127 = vpop.permute.xlu0 %126
  %128 = vrot.lane.b32.xlu0 %v67, 127
  %v129 = vpop.permute.xlu0 %128
  %vm130 = vcmp.lt.s32.totalorder %v77, 127
  %v131 = vsel %vm130, %v127, %v129
  %v132 = vsel %vm130, %v125, %v127
  %v133 = vsel %vm130, %v123, %v125
  %v134 = vsel %vm130, %v129, %v123
  %135 = vrot.lane.b32.xlu0 %v64, 113
  %v136 = vpop.permute.xlu0 %135
  %137 = vrot.lane.b32.xlu0 %v65, 113
  %v138 = vpop.permute.xlu0 %137
  %139 = vrot.lane.b32.xlu0 %v66, 113
  %v140 = vpop.permute.xlu0 %139
  %141 = vrot.lane.b32.xlu0 %v67, 113
  %v142 = vpop.permute.xlu0 %141
  %vm143 = vcmp.lt.s32.totalorder %v77, 113
  %v144 = vsel %vm143, %v140, %v142
  %v145 = vsel %vm143, %v138, %v140
  %v146 = vsel %vm143, %v136, %v138
  %v147 = vsel %vm143, %v142, %v136
  %148 = vrot.lane.b32.xlu0 %v64, 112
  %v149 = vpop.permute.xlu0 %148
  %150 = vrot.lane.b32.xlu0 %v65, 112
  %v151 = vpop.permute.xlu0 %150
  %152 = vrot.lane.b32.xlu0 %v66, 112
  %v153 = vpop.permute.xlu0 %152
  %154 = vrot.lane.b32.xlu0 %v67, 112
  %v155 = vpop.permute.xlu0 %154
  %vm156 = vcmp.lt.s32.totalorder %v77, 112
  %v157 = vsel %vm156, %v153, %v155
  %v158 = vsel %vm156, %v151, %v153
  %v159 = vsel %vm156, %v149, %v151
  %v160 = vsel %vm156, %v155, %v149
  %161 = vrot.lane.b32.xlu0 %v64, 111
  %v162 = vpop.permute.xlu0 %161
  %163 = vrot.lane.b32.xlu0 %v65, 111
  %v164 = vpop.permute.xlu0 %163
  %165 = vrot.lane.b32.xlu0 %v66, 111
  %v166 = vpop.permute.xlu0 %165
  %167 = vrot.lane.b32.xlu0 %v67, 111
  %v168 = vpop.permute.xlu0 %167
  %vm169 = vcmp.lt.s32.totalorder %v77, 111
  %v170 = vsel %vm169, %v166, %v168
  %v171 = vsel %vm169, %v164, %v166
  %v172 = vsel %vm169, %v162, %v164
  %v173 = vsel %vm169, %v168, %v162
  %v174 = vmul.f32 %v82, %v27
  %v175 = vmul.f32 %v81, %v28
  %v176 = vmul.f32 %v80, %v29
  %v177 = vmul.f32 %v79, %v30
  %v178 = vmul.f32 %v95, %v31
  %v179 = vmul.f32 %v94, %v32
  %v180 = vmul.f32 %v93, %v33
  %v181 = vmul.f32 %v92, %v34
  %v182 = vmul.f32 %v108, %v35
  %v183 = vmul.f32 %v107, %v36
  %v184 = vmul.f32 %v106, %v37
  %v185 = vmul.f32 %v105, %v38
  %v186 = vmul.f32 %v121, %v39
  %v187 = vmul.f32 %v120, %v40
  %v188 = vmul.f32 %v119, %v41
  %v189 = vmul.f32 %v118, %v42
  %v190 = vmul.f32 %v64, %v43
  %v191 = vmul.f32 %v65, %v44
  %v192 = vmul.f32 %v66, %v45
  %v193 = vmul.f32 %v67, %v46
  %v194 = vmul.f32 %v133, %v47
  %v195 = vmul.f32 %v132, %v48
  %v196 = vmul.f32 %v131, %v49
  %v197 = vmul.f32 %v134, %v50
  %v198 = vmul.f32 %v146, %v51
  %v199 = vmul.f32 %v145, %v52
  %v200 = vmul.f32 %v144, %v53
  %v201 = vmul.f32 %v147, %v54
  %v202 = vmul.f32 %v159, %v55
  %v203 = vmul.f32 %v158, %v56
  %v204 = vmul.f32 %v157, %v57
  %v205 = vmul.f32 %v160, %v58
  %v206 = vmul.f32 %v172, %v59
  %v207 = vmul.f32 %v171, %v60
  %v208 = vmul.f32 %v170, %v61
  %v209 = vmul.f32 %v173, %v62
  %v210 = vpack.c.bf16 %v178, %v174
  %v211 = vpack.c.bf16 %v179, %v175
  %v212 = vpack.c.bf16 %v180, %v176
  %v213 = vpack.c.bf16 %v181, %v177
  %v214 = vpack.c.bf16 %v186, %v182
  %v215 = vpack.c.bf16 %v187, %v183
  %v216 = vpack.c.bf16 %v188, %v184
  %v217 = vpack.c.bf16 %v189, %v185
  %v218 = vpack.c.bf16 %v194, %v190
  %v219 = vpack.c.bf16 %v195, %v191
  %v220 = vpack.c.bf16 %v196, %v192
  %v221 = vpack.c.bf16 %v197, %v193
  %v222 = vpack.c.bf16 %v202, %v198
  %v223 = vpack.c.bf16 %v203, %v199
  %v224 = vpack.c.bf16 %v204, %v200
  %v225 = vpack.c.bf16 %v205, %v201
  %v226 = vpack.c.bf16 %v206, %v206
  %v227 = vpack.c.bf16 %v207, %v207
  %v228 = vpack.c.bf16 %v208, %v208
  %v229 = vpack.c.bf16 %v209, %v209
  %v230 = vld [vmem:[%s2] sm:$0xf]
  %232 = vset.pattern.permute.xlu0 0
  %233 = vperm.xlu0 %232, %v63
  %v234 = vpop.permute.xlu0 %233
  %vm236 = vcmask 588800
  %v238 = vsel %vm236, %v230, 0
  %vm240 = vcmask 1043456
  %v242 = vsel %vm240, %v226, 0
  %v245 = vsel %vm240, %v227, 0
  %v248 = vsel %vm240, %v228, 0
  %v251 = vsel %vm240, %v229, 0
  %253 = vmatpush.bf16.msra.mxu0 0
  %254 = vmatpush.bf16.msra.mxu0 0
  %255 = vmatpush.bf16.msra.mxu0 0
  %256 = vmatpush.bf16.msra.mxu0 %v242
  %257 = vmatpush.bf16.msra.mxu0 %v222
  %258 = vmatpush.bf16.msra.mxu0 %v218
  %259 = vmatpush.bf16.msra.mxu0 %v214
  %260 = vmatpush.bf16.msra.mxu0 %v210
  %261 = vmatmul.bf16.gmra.mxu0 %v238
  %v262 = vpop.f32.mrf.mxu0
  %v263 = vadd.f32 %v234, %v262
  %v264 = vpop.f32.mrf.mxu0
  %265 = vdwg.mxu0
  %266 = vmatpush.bf16.msra.mxu0 0
  %267 = vmatpush.bf16.msra.mxu0 0
  %268 = vmatpush.bf16.msra.mxu0 0
  %269 = vmatpush.bf16.msra.mxu0 %v245
  %270 = vmatpush.bf16.msra.mxu0 %v223
  %271 = vmatpush.bf16.msra.mxu0 %v219
  %272 = vmatpush.bf16.msra.mxu0 %v215
  %273 = vmatpush.bf16.msra.mxu0 %v211
  %274 = vmatmul.bf16.gmra.mxu0 %v238
  %v275 = vpop.f32.mrf.mxu0
  %v276 = vadd.f32 %v234, %v275
  %v277 = vpop.f32.mrf.mxu0
  %278 = vdwg.mxu0
  %279 = vmatpush.bf16.msra.mxu0 0
  %280 = vmatpush.bf16.msra.mxu0 0
  %281 = vmatpush.bf16.msra.mxu0 0
  %282 = vmatpush.bf16.msra.mxu0 %v248
  %283 = vmatpush.bf16.msra.mxu0 %v224
  %284 = vmatpush.bf16.msra.mxu0 %v220
  %285 = vmatpush.bf16.msra.mxu0 %v216
  %286 = vmatpush.bf16.msra.mxu0 %v212
  %287 = vmatmul.bf16.gmra.mxu0 %v238
  %v288 = vpop.f32.mrf.mxu0
  %v289 = vadd.f32 %v234, %v288
  %v290 = vpop.f32.mrf.mxu0
  %291 = vdwg.mxu0
  %292 = vmatpush.bf16.msra.mxu0 0
  %293 = vmatpush.bf16.msra.mxu0 0
  %294 = vmatpush.bf16.msra.mxu0 0
  %295 = vmatpush.bf16.msra.mxu0 %v251
  %296 = vmatpush.bf16.msra.mxu0 %v225
  %297 = vmatpush.bf16.msra.mxu0 %v221
  %298 = vmatpush.bf16.msra.mxu0 %v217
  %299 = vmatpush.bf16.msra.mxu0 %v213
  %300 = vmatmul.bf16.gmra.mxu0 %v238
  %v301 = vpop.f32.mrf.mxu0
  %v302 = vadd.f32 %v234, %v301
  %v303 = vpop.f32.mrf.mxu0
  %304 = vdwg.mxu0
  %v305 = vadd.f32 %v263, %v276
  %306 = vadd.xlane.f32.xlu0 %v305
  %v307 = vpop.xlane.xlu0 %306
  %v308 = vmul.f32 %v263, %v263
  %v309 = vmul.f32 %v276, %v276
  %v310 = vadd.f32 %v308, %v309
  %311 = vadd.xlane.f32.xlu0 %v310
  %v312 = vpop.xlane.xlu0 %311
  %v313 = vmul.f32 %v307, 0.00390625
  %v314 = vmul.f32 %v312, 0.00390625
  %v315 = vmul.f32 %v313, %v313
  %v316 = vsub.f32 %v314, %v315
  %v317 = vmax.f32 %v316, 0.0
  %v318 = vadd.f32 %v317, 1e-05
  %v319 = vrsqrt.pop %v318
  %v320 = vmul.f32 %v319, %v318
  %v321 = vmul.f32 %v320, %v319
  %v322 = vmul.f32 0.5, %v321
  %v323 = vsub.f32 1.5, %v322
  %v324 = vmul.f32 %v319, %v323
  %vm325 = vweird.f32 %v318
  %vm326 = vweird.f32 %v319
  %vm327 = vmor %vm325, %vm326
  %v328 = vsel %vm327, %v319, %v324
  %v329 = vsub.f32 %v263, %v313
  %v330 = vsub.f32 %v276, %v313
  %v331 = vmul.f32 %v329, %v328
  %v332 = vmul.f32 %v330, %v328
  %v333 = vadd.f32 %v289, %v302
  %334 = vadd.xlane.f32.xlu0 %v333
  %v335 = vpop.xlane.xlu0 %334
  %v336 = vmul.f32 %v289, %v289
  %v337 = vmul.f32 %v302, %v302
  %v338 = vadd.f32 %v336, %v337
  %339 = vadd.xlane.f32.xlu0 %v338
  %v340 = vpop.xlane.xlu0 %339
  %v341 = vmul.f32 %v335, 0.00390625
  %v342 = vmul.f32 %v340, 0.00390625
  %v343 = vmul.f32 %v341, %v341
  %v344 = vsub.f32 %v342, %v343
  %v345 = vmax.f32 %v344, 0.0
  %v346 = vadd.f32 %v345, 1e-05
  %v347 = vrsqrt.pop %v346
  %v348 = vmul.f32 %v347, %v346
  %v349 = vmul.f32 %v348, %v347
  %v350 = vmul.f32 0.5, %v349
  %v351 = vsub.f32 1.5, %v350
  %v352 = vmul.f32 %v347, %v351
  %vm353 = vweird.f32 %v346
  %vm354 = vweird.f32 %v347
  %vm355 = vmor %vm353, %vm354
  %v356 = vsel %vm355, %v347, %v352
  %v357 = vsub.f32 %v289, %v341
  %v358 = vsub.f32 %v302, %v341
  %v359 = vmul.f32 %v357, %v356
  %v360 = vmul.f32 %v358, %v356
  %361 = vset.pattern.permute.xlu0 1
  %362 = vperm.xlu0 %361, %v63
  %v363 = vpop.permute.xlu0 %362
  %v365 = vmul.f32 %v331, %v363
  %v366 = vmul.f32 %v332, %v363
  %v367 = vmul.f32 %v359, %v363
  %v368 = vmul.f32 %v360, %v363
  %369 = vset.pattern.permute.xlu0 2
  %370 = vperm.xlu0 %369, %v63
  %v371 = vpop.permute.xlu0 %370
  %v373 = vadd.f32 %v365, %v371
  %v374 = vadd.f32 %v366, %v371
  %v375 = vadd.f32 %v367, %v371
  %v376 = vadd.f32 %v368, %v371
  %v377 = vmax.f32 %v373, 0.0
  %v378 = vmax.f32 %v374, 0.0
  %v379 = vmax.f32 %v375, 0.0
  %v380 = vmax.f32 %v376, 0.0
  %381 = vrot.lane.b32.xlu0 %v377, 17
  %v382 = vpop.permute.xlu0 %381
  %383 = vrot.lane.b32.xlu0 %v378, 17
  %v384 = vpop.permute.xlu0 %383
  %385 = vrot.lane.b32.xlu0 %v379, 17
  %v386 = vpop.permute.xlu0 %385
  %387 = vrot.lane.b32.xlu0 %v380, 17
  %v388 = vpop.permute.xlu0 %387
  %v389 = vsel %vm78, %v386, %v388
  %v390 = vsel %vm78, %v384, %v386
  %v391 = vsel %vm78, %v382, %v384
  %v392 = vsel %vm78, %v388, %v382
  %393 = vrot.lane.b32.xlu0 %v377, 16
  %v394 = vpop.permute.xlu0 %393
  %395 = vrot.lane.b32.xlu0 %v378, 16
  %v396 = vpop.permute.xlu0 %395
  %397 = vrot.lane.b32.xlu0 %v379, 16
  %v398 = vpop.permute.xlu0 %397
  %399 = vrot.lane.b32.xlu0 %v380, 16
  %v400 = vpop.permute.xlu0 %399
  %v401 = vsel %vm91, %v398, %v400
  %v402 = vsel %vm91, %v396, %v398
  %v403 = vsel %vm91, %v394, %v396
  %v404 = vsel %vm91, %v400, %v394
  %405 = vrot.lane.b32.xlu0 %v377, 15
  %v406 = vpop.permute.xlu0 %405
  %407 = vrot.lane.b32.xlu0 %v378, 15
  %v408 = vpop.permute.xlu0 %407
  %409 = vrot.lane.b32.xlu0 %v379, 15
  %v410 = vpop.permute.xlu0 %409
  %411 = vrot.lane.b32.xlu0 %v380, 15
  %v412 = vpop.permute.xlu0 %411
  %v413 = vsel %vm104, %v410, %v412
  %v414 = vsel %vm104, %v408, %v410
  %v415 = vsel %vm104, %v406, %v408
  %v416 = vsel %vm104, %v412, %v406
  %417 = vrot.lane.b32.xlu0 %v377, 1
  %v418 = vpop.permute.xlu0 %417
  %419 = vrot.lane.b32.xlu0 %v378, 1
  %v420 = vpop.permute.xlu0 %419
  %421 = vrot.lane.b32.xlu0 %v379, 1
  %v422 = vpop.permute.xlu0 %421
  %423 = vrot.lane.b32.xlu0 %v380, 1
  %v424 = vpop.permute.xlu0 %423
  %v425 = vsel %vm117, %v422, %v424
  %v426 = vsel %vm117, %v420, %v422
  %v427 = vsel %vm117, %v418, %v420
  %v428 = vsel %vm117, %v424, %v418
  %429 = vrot.lane.b32.xlu0 %v377, 127
  %v430 = vpop.permute.xlu0 %429
  %431 = vrot.lane.b32.xlu0 %v378, 127
  %v432 = vpop.permute.xlu0 %431
  %433 = vrot.lane.b32.xlu0 %v379, 127
  %v434 = vpop.permute.xlu0 %433
  %435 = vrot.lane.b32.xlu0 %v380, 127
  %v436 = vpop.permute.xlu0 %435
  %v437 = vsel %vm130, %v434, %v436
  %v438 = vsel %vm130, %v432, %v434
  %v439 = vsel %vm130, %v430, %v432
  %v440 = vsel %vm130, %v436, %v430
  %441 = vrot.lane.b32.xlu0 %v377, 113
  %v442 = vpop.permute.xlu0 %441
  %443 = vrot.lane.b32.xlu0 %v378, 113
  %v444 = vpop.permute.xlu0 %443
  %445 = vrot.lane.b32.xlu0 %v379, 113
  %v446 = vpop.permute.xlu0 %445
  %447 = vrot.lane.b32.xlu0 %v380, 113
  %v448 = vpop.permute.xlu0 %447
  %v449 = vsel %vm143, %v446, %v448
  %v450 = vsel %vm143, %v444, %v446
  %v451 = vsel %vm143, %v442, %v444
  %v452 = vsel %vm143, %v448, %v442
  %453 = vrot.lane.b32.xlu0 %v377, 112
  %v454 = vpop.permute.xlu0 %453
  %455 = vrot.lane.b32.xlu0 %v378, 112
  %v456 = vpop.permute.xlu0 %455
  %457 = vrot.lane.b32.xlu0 %v379, 112
  %v458 = vpop.permute.xlu0 %457
  %459 = vrot.lane.b32.xlu0 %v380, 112
  %v460 = vpop.permute.xlu0 %459
  %v461 = vsel %vm156, %v458, %v460
  %v462 = vsel %vm156, %v456, %v458
  %v463 = vsel %vm156, %v454, %v456
  %v464 = vsel %vm156, %v460, %v454
  %465 = vrot.lane.b32.xlu0 %v377, 111
  %v466 = vpop.permute.xlu0 %465
  %467 = vrot.lane.b32.xlu0 %v378, 111
  %v468 = vpop.permute.xlu0 %467
  %469 = vrot.lane.b32.xlu0 %v379, 111
  %v470 = vpop.permute.xlu0 %469
  %471 = vrot.lane.b32.xlu0 %v380, 111
  %v472 = vpop.permute.xlu0 %471
  %v473 = vsel %vm169, %v470, %v472
  %v474 = vsel %vm169, %v468, %v470
  %v475 = vsel %vm169, %v466, %v468
  %v476 = vsel %vm169, %v472, %v466
  %v477 = vmul.f32 %v392, %v27
  %v478 = vmul.f32 %v391, %v28
  %v479 = vmul.f32 %v390, %v29
  %v480 = vmul.f32 %v389, %v30
  %v481 = vmul.f32 %v404, %v31
  %v482 = vmul.f32 %v403, %v32
  %v483 = vmul.f32 %v402, %v33
  %v484 = vmul.f32 %v401, %v34
  %v485 = vmul.f32 %v416, %v35
  %v486 = vmul.f32 %v415, %v36
  %v487 = vmul.f32 %v414, %v37
  %v488 = vmul.f32 %v413, %v38
  %v489 = vmul.f32 %v428, %v39
  %v490 = vmul.f32 %v427, %v40
  %v491 = vmul.f32 %v426, %v41
  %v492 = vmul.f32 %v425, %v42
  %v493 = vmul.f32 %v377, %v43
  %v494 = vmul.f32 %v378, %v44
  %v495 = vmul.f32 %v379, %v45
  %v496 = vmul.f32 %v380, %v46
  %v497 = vmul.f32 %v439, %v47
  %v498 = vmul.f32 %v438, %v48
  %v499 = vmul.f32 %v437, %v49
  %v500 = vmul.f32 %v440, %v50
  %v501 = vmul.f32 %v451, %v51
  %v502 = vmul.f32 %v450, %v52
  %v503 = vmul.f32 %v449, %v53
  %v504 = vmul.f32 %v452, %v54
  %v505 = vmul.f32 %v463, %v55
  %v506 = vmul.f32 %v462, %v56
  %v507 = vmul.f32 %v461, %v57
  %v508 = vmul.f32 %v464, %v58
  %v509 = vmul.f32 %v475, %v59
  %v510 = vmul.f32 %v474, %v60
  %v511 = vmul.f32 %v473, %v61
  %v512 = vmul.f32 %v476, %v62
  %v513 = vpack.c.bf16 %v481, %v477
  %v514 = vpack.c.bf16 %v482, %v478
  %v515 = vpack.c.bf16 %v483, %v479
  %v516 = vpack.c.bf16 %v484, %v480
  %v517 = vpack.c.bf16 %v489, %v485
  %v518 = vpack.c.bf16 %v490, %v486
  %v519 = vpack.c.bf16 %v491, %v487
  %v520 = vpack.c.bf16 %v492, %v488
  %v521 = vpack.c.bf16 %v497, %v493
  %v522 = vpack.c.bf16 %v498, %v494
  %v523 = vpack.c.bf16 %v499, %v495
  %v524 = vpack.c.bf16 %v500, %v496
  %v525 = vpack.c.bf16 %v505, %v501
  %v526 = vpack.c.bf16 %v506, %v502
  %v527 = vpack.c.bf16 %v507, %v503
  %v528 = vpack.c.bf16 %v508, %v504
  %v529 = vpack.c.bf16 %v509, %v509
  %v530 = vpack.c.bf16 %v510, %v510
  %v531 = vpack.c.bf16 %v511, %v511
  %v532 = vpack.c.bf16 %v512, %v512
  %v533 = vld [vmem:[%s3] sm:$0xf]
  %534 = vset.pattern.permute.xlu0 3
  %535 = vperm.xlu0 %534, %v63
  %v536 = vpop.permute.xlu0 %535
  %v539 = vsel %vm236, %v533, 0
  %v542 = vsel %vm240, %v529, 0
  %v545 = vsel %vm240, %v530, 0
  %v548 = vsel %vm240, %v531, 0
  %v551 = vsel %vm240, %v532, 0
  %553 = vmatpush.bf16.msra.mxu0 0
  %554 = vmatpush.bf16.msra.mxu0 0
  %555 = vmatpush.bf16.msra.mxu0 0
  %556 = vmatpush.bf16.msra.mxu0 %v542
  %557 = vmatpush.bf16.msra.mxu0 %v525
  %558 = vmatpush.bf16.msra.mxu0 %v521
  %559 = vmatpush.bf16.msra.mxu0 %v517
  %560 = vmatpush.bf16.msra.mxu0 %v513
  %561 = vmatmul.bf16.gmra.mxu0 %v539
  %v562 = vpop.f32.mrf.mxu0
  %v563 = vadd.f32 %v536, %v562
  %v564 = vpop.f32.mrf.mxu0
  %565 = vdwg.mxu0
  %566 = vmatpush.bf16.msra.mxu0 0
  %567 = vmatpush.bf16.msra.mxu0 0
  %568 = vmatpush.bf16.msra.mxu0 0
  %569 = vmatpush.bf16.msra.mxu0 %v545
  %570 = vmatpush.bf16.msra.mxu0 %v526
  %571 = vmatpush.bf16.msra.mxu0 %v522
  %572 = vmatpush.bf16.msra.mxu0 %v518
  %573 = vmatpush.bf16.msra.mxu0 %v514
  %574 = vmatmul.bf16.gmra.mxu0 %v539
  %v575 = vpop.f32.mrf.mxu0
  %v576 = vadd.f32 %v536, %v575
  %v577 = vpop.f32.mrf.mxu0
  %578 = vdwg.mxu0
  %579 = vmatpush.bf16.msra.mxu0 0
  %580 = vmatpush.bf16.msra.mxu0 0
  %581 = vmatpush.bf16.msra.mxu0 0
  %582 = vmatpush.bf16.msra.mxu0 %v548
  %583 = vmatpush.bf16.msra.mxu0 %v527
  %584 = vmatpush.bf16.msra.mxu0 %v523
  %585 = vmatpush.bf16.msra.mxu0 %v519
  %586 = vmatpush.bf16.msra.mxu0 %v515
  %587 = vmatmul.bf16.gmra.mxu0 %v539
  %v588 = vpop.f32.mrf.mxu0
  %v589 = vadd.f32 %v536, %v588
  %v590 = vpop.f32.mrf.mxu0
  %591 = vdwg.mxu0
  %592 = vmatpush.bf16.msra.mxu0 0
  %593 = vmatpush.bf16.msra.mxu0 0
  %594 = vmatpush.bf16.msra.mxu0 0
  %595 = vmatpush.bf16.msra.mxu0 %v551
  %596 = vmatpush.bf16.msra.mxu0 %v528
  %597 = vmatpush.bf16.msra.mxu0 %v524
  %598 = vmatpush.bf16.msra.mxu0 %v520
  %599 = vmatpush.bf16.msra.mxu0 %v516
  %600 = vmatmul.bf16.gmra.mxu0 %v539
  %v601 = vpop.f32.mrf.mxu0
  %v602 = vadd.f32 %v536, %v601
  %v603 = vpop.f32.mrf.mxu0
  %604 = vdwg.mxu0
  %v605 = vadd.f32 %v563, %v576
  %606 = vadd.xlane.f32.xlu0 %v605
  %v607 = vpop.xlane.xlu0 %606
  %v608 = vmul.f32 %v563, %v563
  %v609 = vmul.f32 %v576, %v576
  %v610 = vadd.f32 %v608, %v609
  %611 = vadd.xlane.f32.xlu0 %v610
  %v612 = vpop.xlane.xlu0 %611
  %v613 = vmul.f32 %v607, 0.00390625
  %v614 = vmul.f32 %v612, 0.00390625
  %v615 = vmul.f32 %v613, %v613
  %v616 = vsub.f32 %v614, %v615
  %v617 = vmax.f32 %v616, 0.0
  %v618 = vadd.f32 %v617, 1e-05
  %v619 = vrsqrt.pop %v618
  %v620 = vmul.f32 %v619, %v618
  %v621 = vmul.f32 %v620, %v619
  %v622 = vmul.f32 0.5, %v621
  %v623 = vsub.f32 1.5, %v622
  %v624 = vmul.f32 %v619, %v623
  %vm625 = vweird.f32 %v618
  %vm626 = vweird.f32 %v619
  %vm627 = vmor %vm625, %vm626
  %v628 = vsel %vm627, %v619, %v624
  %v629 = vsub.f32 %v563, %v613
  %v630 = vsub.f32 %v576, %v613
  %v631 = vmul.f32 %v629, %v628
  %v632 = vmul.f32 %v630, %v628
  %v633 = vadd.f32 %v589, %v602
  %634 = vadd.xlane.f32.xlu0 %v633
  %v635 = vpop.xlane.xlu0 %634
  %v636 = vmul.f32 %v589, %v589
  %v637 = vmul.f32 %v602, %v602
  %v638 = vadd.f32 %v636, %v637
  %639 = vadd.xlane.f32.xlu0 %v638
  %v640 = vpop.xlane.xlu0 %639
  %v641 = vmul.f32 %v635, 0.00390625
  %v642 = vmul.f32 %v640, 0.00390625
  %v643 = vmul.f32 %v641, %v641
  %v644 = vsub.f32 %v642, %v643
  %v645 = vmax.f32 %v644, 0.0
  %v646 = vadd.f32 %v645, 1e-05
  %v647 = vrsqrt.pop %v646
  %v648 = vmul.f32 %v647, %v646
  %v649 = vmul.f32 %v648, %v647
  %v650 = vmul.f32 0.5, %v649
  %v651 = vsub.f32 1.5, %v650
  %v652 = vmul.f32 %v647, %v651
  %vm653 = vweird.f32 %v646
  %vm654 = vweird.f32 %v647
  %vm655 = vmor %vm653, %vm654
  %v656 = vsel %vm655, %v647, %v652
  %v657 = vsub.f32 %v589, %v641
  %v658 = vsub.f32 %v602, %v641
  %v659 = vmul.f32 %v657, %v656
  %v660 = vmul.f32 %v658, %v656
  %661 = vset.pattern.permute.xlu0 4
  %662 = vperm.xlu0 %661, %v63
  %v663 = vpop.permute.xlu0 %662
  %v665 = vmul.f32 %v631, %v663
  %v666 = vmul.f32 %v632, %v663
  %v667 = vmul.f32 %v659, %v663
  %v668 = vmul.f32 %v660, %v663
  %669 = vset.pattern.permute.xlu0 5
  %670 = vperm.xlu0 %669, %v63
  %v671 = vpop.permute.xlu0 %670
  %v673 = vadd.f32 %v665, %v671
  %v674 = vadd.f32 %v666, %v671
  %v675 = vadd.f32 %v667, %v671
  %v676 = vadd.f32 %v668, %v671
  %v677 = vmax.f32 %v673, 0.0
  %v678 = vmax.f32 %v674, 0.0
  %v679 = vmax.f32 %v675, 0.0
  %v680 = vmax.f32 %v676, 0.0
  %681 = vrot.lane.b32.xlu0 %v677, 17
  %v682 = vpop.permute.xlu0 %681
  %683 = vrot.lane.b32.xlu0 %v678, 17
  %v684 = vpop.permute.xlu0 %683
  %685 = vrot.lane.b32.xlu0 %v679, 17
  %v686 = vpop.permute.xlu0 %685
  %687 = vrot.lane.b32.xlu0 %v680, 17
  %v688 = vpop.permute.xlu0 %687
  %v689 = vsel %vm78, %v686, %v688
  %v690 = vsel %vm78, %v684, %v686
  %v691 = vsel %vm78, %v682, %v684
  %v692 = vsel %vm78, %v688, %v682
  %693 = vrot.lane.b32.xlu0 %v677, 16
  %v694 = vpop.permute.xlu0 %693
  %695 = vrot.lane.b32.xlu0 %v678, 16
  %v696 = vpop.permute.xlu0 %695
  %697 = vrot.lane.b32.xlu0 %v679, 16
  %v698 = vpop.permute.xlu0 %697
  %699 = vrot.lane.b32.xlu0 %v680, 16
  %v700 = vpop.permute.xlu0 %699
  %v701 = vsel %vm91, %v698, %v700
  %v702 = vsel %vm91, %v696, %v698
  %v703 = vsel %vm91, %v694, %v696
  %v704 = vsel %vm91, %v700, %v694
  %705 = vrot.lane.b32.xlu0 %v677, 15
  %v706 = vpop.permute.xlu0 %705
  %707 = vrot.lane.b32.xlu0 %v678, 15
  %v708 = vpop.permute.xlu0 %707
  %709 = vrot.lane.b32.xlu0 %v679, 15
  %v710 = vpop.permute.xlu0 %709
  %711 = vrot.lane.b32.xlu0 %v680, 15
  %v712 = vpop.permute.xlu0 %711
  %v713 = vsel %vm104, %v710, %v712
  %v714 = vsel %vm104, %v708, %v710
  %v715 = vsel %vm104, %v706, %v708
  %v716 = vsel %vm104, %v712, %v706
  %717 = vrot.lane.b32.xlu0 %v677, 1
  %v718 = vpop.permute.xlu0 %717
  %719 = vrot.lane.b32.xlu0 %v678, 1
  %v720 = vpop.permute.xlu0 %719
  %721 = vrot.lane.b32.xlu0 %v679, 1
  %v722 = vpop.permute.xlu0 %721
  %723 = vrot.lane.b32.xlu0 %v680, 1
  %v724 = vpop.permute.xlu0 %723
  %v725 = vsel %vm117, %v722, %v724
  %v726 = vsel %vm117, %v720, %v722
  %v727 = vsel %vm117, %v718, %v720
  %v728 = vsel %vm117, %v724, %v718
  %729 = vrot.lane.b32.xlu0 %v677, 127
  %v730 = vpop.permute.xlu0 %729
  %731 = vrot.lane.b32.xlu0 %v678, 127
  %v732 = vpop.permute.xlu0 %731
  %733 = vrot.lane.b32.xlu0 %v679, 127
  %v734 = vpop.permute.xlu0 %733
  %735 = vrot.lane.b32.xlu0 %v680, 127
  %v736 = vpop.permute.xlu0 %735
  %v737 = vsel %vm130, %v734, %v736
  %v738 = vsel %vm130, %v732, %v734
  %v739 = vsel %vm130, %v730, %v732
  %v740 = vsel %vm130, %v736, %v730
  %741 = vrot.lane.b32.xlu0 %v677, 113
  %v742 = vpop.permute.xlu0 %741
  %743 = vrot.lane.b32.xlu0 %v678, 113
  %v744 = vpop.permute.xlu0 %743
  %745 = vrot.lane.b32.xlu0 %v679, 113
  %v746 = vpop.permute.xlu0 %745
  %747 = vrot.lane.b32.xlu0 %v680, 113
  %v748 = vpop.permute.xlu0 %747
  %v749 = vsel %vm143, %v746, %v748
  %v750 = vsel %vm143, %v744, %v746
  %v751 = vsel %vm143, %v742, %v744
  %v752 = vsel %vm143, %v748, %v742
  %753 = vrot.lane.b32.xlu0 %v677, 112
  %v754 = vpop.permute.xlu0 %753
  %755 = vrot.lane.b32.xlu0 %v678, 112
  %v756 = vpop.permute.xlu0 %755
  %757 = vrot.lane.b32.xlu0 %v679, 112
  %v758 = vpop.permute.xlu0 %757
  %759 = vrot.lane.b32.xlu0 %v680, 112
  %v760 = vpop.permute.xlu0 %759
  %v761 = vsel %vm156, %v758, %v760
  %v762 = vsel %vm156, %v756, %v758
  %v763 = vsel %vm156, %v754, %v756
  %v764 = vsel %vm156, %v760, %v754
  %765 = vrot.lane.b32.xlu0 %v677, 111
  %v766 = vpop.permute.xlu0 %765
  %767 = vrot.lane.b32.xlu0 %v678, 111
  %v768 = vpop.permute.xlu0 %767
  %769 = vrot.lane.b32.xlu0 %v679, 111
  %v770 = vpop.permute.xlu0 %769
  %771 = vrot.lane.b32.xlu0 %v680, 111
  %v772 = vpop.permute.xlu0 %771
  %v773 = vsel %vm169, %v770, %v772
  %v774 = vsel %vm169, %v768, %v770
  %v775 = vsel %vm169, %v766, %v768
  %v776 = vsel %vm169, %v772, %v766
  %v777 = vmul.f32 %v692, %v27
  %v778 = vmul.f32 %v691, %v28
  %v779 = vmul.f32 %v690, %v29
  %v780 = vmul.f32 %v689, %v30
  %v781 = vmul.f32 %v704, %v31
  %v782 = vmul.f32 %v703, %v32
  %v783 = vmul.f32 %v702, %v33
  %v784 = vmul.f32 %v701, %v34
  %v785 = vmul.f32 %v716, %v35
  %v786 = vmul.f32 %v715, %v36
  %v787 = vmul.f32 %v714, %v37
  %v788 = vmul.f32 %v713, %v38
  %v789 = vmul.f32 %v728, %v39
  %v790 = vmul.f32 %v727, %v40
  %v791 = vmul.f32 %v726, %v41
  %v792 = vmul.f32 %v725, %v42
  %v793 = vmul.f32 %v677, %v43
  %v794 = vmul.f32 %v678, %v44
  %v795 = vmul.f32 %v679, %v45
  %v796 = vmul.f32 %v680, %v46
  %v797 = vmul.f32 %v739, %v47
  %v798 = vmul.f32 %v738, %v48
  %v799 = vmul.f32 %v737, %v49
  %v800 = vmul.f32 %v740, %v50
  %v801 = vmul.f32 %v751, %v51
  %v802 = vmul.f32 %v750, %v52
  %v803 = vmul.f32 %v749, %v53
  %v804 = vmul.f32 %v752, %v54
  %v805 = vmul.f32 %v763, %v55
  %v806 = vmul.f32 %v762, %v56
  %v807 = vmul.f32 %v761, %v57
  %v808 = vmul.f32 %v764, %v58
  %v809 = vmul.f32 %v775, %v59
  %v810 = vmul.f32 %v774, %v60
  %v811 = vmul.f32 %v773, %v61
  %v812 = vmul.f32 %v776, %v62
  %v813 = vpack.c.bf16 %v781, %v777
  %v814 = vpack.c.bf16 %v782, %v778
  %v815 = vpack.c.bf16 %v783, %v779
  %v816 = vpack.c.bf16 %v784, %v780
  %v817 = vpack.c.bf16 %v789, %v785
  %v818 = vpack.c.bf16 %v790, %v786
  %v819 = vpack.c.bf16 %v791, %v787
  %v820 = vpack.c.bf16 %v792, %v788
  %v821 = vpack.c.bf16 %v797, %v793
  %v822 = vpack.c.bf16 %v798, %v794
  %v823 = vpack.c.bf16 %v799, %v795
  %v824 = vpack.c.bf16 %v800, %v796
  %v825 = vpack.c.bf16 %v805, %v801
  %v826 = vpack.c.bf16 %v806, %v802
  %v827 = vpack.c.bf16 %v807, %v803
  %v828 = vpack.c.bf16 %v808, %v804
  %v829 = vpack.c.bf16 %v809, %v809
  %v830 = vpack.c.bf16 %v810, %v810
  %v831 = vpack.c.bf16 %v811, %v811
  %v832 = vpack.c.bf16 %v812, %v812
  %v833 = vld [vmem:[%s4] sm:$0xf]
  %834 = vset.pattern.permute.xlu0 6
  %835 = vperm.xlu0 %834, %v63
  %v836 = vpop.permute.xlu0 %835
  %v839 = vsel %vm236, %v833, 0
  %v842 = vsel %vm240, %v829, 0
  %v845 = vsel %vm240, %v830, 0
  %v848 = vsel %vm240, %v831, 0
  %v851 = vsel %vm240, %v832, 0
  %853 = vmatpush.bf16.msra.mxu0 0
  %854 = vmatpush.bf16.msra.mxu0 0
  %855 = vmatpush.bf16.msra.mxu0 0
  %856 = vmatpush.bf16.msra.mxu0 %v842
  %857 = vmatpush.bf16.msra.mxu0 %v825
  %858 = vmatpush.bf16.msra.mxu0 %v821
  %859 = vmatpush.bf16.msra.mxu0 %v817
  %860 = vmatpush.bf16.msra.mxu0 %v813
  %861 = vmatmul.bf16.gmra.mxu0 %v839
  %v862 = vpop.f32.mrf.mxu0
  %v863 = vadd.f32 %v836, %v862
  %v864 = vpop.f32.mrf.mxu0
  %865 = vdwg.mxu0
  %866 = vmatpush.bf16.msra.mxu0 0
  %867 = vmatpush.bf16.msra.mxu0 0
  %868 = vmatpush.bf16.msra.mxu0 0
  %869 = vmatpush.bf16.msra.mxu0 %v845
  %870 = vmatpush.bf16.msra.mxu0 %v826
  %871 = vmatpush.bf16.msra.mxu0 %v822
  %872 = vmatpush.bf16.msra.mxu0 %v818
  %873 = vmatpush.bf16.msra.mxu0 %v814
  %874 = vmatmul.bf16.gmra.mxu0 %v839
  %v875 = vpop.f32.mrf.mxu0
  %v876 = vadd.f32 %v836, %v875
  %v877 = vpop.f32.mrf.mxu0
  %878 = vdwg.mxu0
  %879 = vmatpush.bf16.msra.mxu0 0
  %880 = vmatpush.bf16.msra.mxu0 0
  %881 = vmatpush.bf16.msra.mxu0 0
  %882 = vmatpush.bf16.msra.mxu0 %v848
  %883 = vmatpush.bf16.msra.mxu0 %v827
  %884 = vmatpush.bf16.msra.mxu0 %v823
  %885 = vmatpush.bf16.msra.mxu0 %v819
  %886 = vmatpush.bf16.msra.mxu0 %v815
  %887 = vmatmul.bf16.gmra.mxu0 %v839
  %v888 = vpop.f32.mrf.mxu0
  %v889 = vadd.f32 %v836, %v888
  %v890 = vpop.f32.mrf.mxu0
  %891 = vdwg.mxu0
  %892 = vmatpush.bf16.msra.mxu0 0
  %893 = vmatpush.bf16.msra.mxu0 0
  %894 = vmatpush.bf16.msra.mxu0 0
  %895 = vmatpush.bf16.msra.mxu0 %v851
  %896 = vmatpush.bf16.msra.mxu0 %v828
  %897 = vmatpush.bf16.msra.mxu0 %v824
  %898 = vmatpush.bf16.msra.mxu0 %v820
  %899 = vmatpush.bf16.msra.mxu0 %v816
  %900 = vmatmul.bf16.gmra.mxu0 %v839
  %v901 = vpop.f32.mrf.mxu0
  %v902 = vadd.f32 %v836, %v901
  %v903 = vpop.f32.mrf.mxu0
  %904 = vdwg.mxu0
  %v905 = vadd.f32 %v863, %v263
  %v906 = vadd.f32 %v876, %v276
  %v907 = vadd.f32 %v889, %v289
  %v908 = vadd.f32 %v902, %v302
  %v909 = vadd.f32 %v905, %v906
  %910 = vadd.xlane.f32.xlu0 %v909
  %v911 = vpop.xlane.xlu0 %910
  %v912 = vmul.f32 %v905, %v905
  %v913 = vmul.f32 %v906, %v906
  %v914 = vadd.f32 %v912, %v913
  %915 = vadd.xlane.f32.xlu0 %v914
  %v916 = vpop.xlane.xlu0 %915
  %v917 = vmul.f32 %v911, 0.00390625
  %v918 = vmul.f32 %v916, 0.00390625
  %v919 = vmul.f32 %v917, %v917
  %v920 = vsub.f32 %v918, %v919
  %v921 = vmax.f32 %v920, 0.0
  %v922 = vadd.f32 %v921, 1e-05
  %v923 = vrsqrt.pop %v922
  %v924 = vmul.f32 %v923, %v922
  %v925 = vmul.f32 %v924, %v923
  %v926 = vmul.f32 0.5, %v925
  %v927 = vsub.f32 1.5, %v926
  %v928 = vmul.f32 %v923, %v927
  %vm929 = vweird.f32 %v922
  %vm930 = vweird.f32 %v923
  %vm931 = vmor %vm929, %vm930
  %v932 = vsel %vm931, %v923, %v928
  %v933 = vsub.f32 %v905, %v917
  %v934 = vsub.f32 %v906, %v917
  %v935 = vmul.f32 %v933, %v932
  %v936 = vmul.f32 %v934, %v932
  %v937 = vadd.f32 %v907, %v908
  %938 = vadd.xlane.f32.xlu0 %v937
  %v939 = vpop.xlane.xlu0 %938
  %v940 = vmul.f32 %v907, %v907
  %v941 = vmul.f32 %v908, %v908
  %v942 = vadd.f32 %v940, %v941
  %943 = vadd.xlane.f32.xlu0 %v942
  %v944 = vpop.xlane.xlu0 %943
  %v945 = vmul.f32 %v939, 0.00390625
  %v946 = vmul.f32 %v944, 0.00390625
  %v947 = vmul.f32 %v945, %v945
  %v948 = vsub.f32 %v946, %v947
  %v949 = vmax.f32 %v948, 0.0
  %v950 = vadd.f32 %v949, 1e-05
  %v951 = vrsqrt.pop %v950
  %v952 = vmul.f32 %v951, %v950
  %v953 = vmul.f32 %v952, %v951
  %v954 = vmul.f32 0.5, %v953
  %v955 = vsub.f32 1.5, %v954
  %v956 = vmul.f32 %v951, %v955
  %vm957 = vweird.f32 %v950
  %vm958 = vweird.f32 %v951
  %vm959 = vmor %vm957, %vm958
  %v960 = vsel %vm959, %v951, %v956
  %v961 = vsub.f32 %v907, %v945
  %v962 = vsub.f32 %v908, %v945
  %v963 = vmul.f32 %v961, %v960
  %v964 = vmul.f32 %v962, %v960
  %965 = vset.pattern.permute.xlu0 7
  %966 = vperm.xlu0 %965, %v63
  %v967 = vpop.permute.xlu0 %966
  %v969 = vmul.f32 %v935, %v967
  %v970 = vmul.f32 %v936, %v967
  %v971 = vmul.f32 %v963, %v967
  %v972 = vmul.f32 %v964, %v967
  %973 = vset.pattern.permute.xlu0 8
  %974 = vperm.xlu0 %973, %v63
  %v975 = vpop.permute.xlu0 %974
  %v977 = vadd.f32 %v969, %v975
  %v978 = vadd.f32 %v970, %v975
  %v979 = vadd.f32 %v971, %v975
  %v980 = vadd.f32 %v972, %v975
  %v981 = vmax.f32 %v977, 0.0
  %v982 = vmax.f32 %v978, 0.0
  %v983 = vmax.f32 %v979, 0.0
  %v984 = vmax.f32 %v980, 0.0
  %v985 = vld [vmem:[%s5] sm:$0x1]
  %v986 = vpack.c.bf16 1.0, %v981
  %v987 = vpack.c.bf16 1.0, %v982
  %v988 = vpack.c.bf16 1.0, %v983
  %v989 = vpack.c.bf16 1.0, %v984
  %vm990 = vcmask 72704
  %v992 = vsel %vm990, %v985, 0
  %vm994 = vcmask 1044480
  %v995 = vsel %vm240, 4294967295, 65535
  %v996 = vsel %vm994, %v995, 0
  %v998 = vand.u32 %v986, %v996
  %v1001 = vand.u32 %v987, %v996
  %v1004 = vand.u32 %v988, %v996
  %v1007 = vand.u32 %v989, %v996
  %1009 = vmatpush.bf16.msra.mxu0 0
  %1010 = vmatpush.bf16.msra.mxu0 0
  %1011 = vmatpush.bf16.msra.mxu0 0
  %1012 = vmatpush.bf16.msra.mxu0 0
  %1013 = vmatpush.bf16.msra.mxu0 0
  %1014 = vmatpush.bf16.msra.mxu0 0
  %1015 = vmatpush.bf16.msra.mxu0 0
  %1016 = vmatpush.bf16.msra.mxu0 %v998
  %1017 = vmatmul.bf16.gmra.mxu0 %v992
  %v1018 = vpop.f32.mrf.mxu0
  %v1019 = vadd.f32 0.0, %v1018
  %v1020 = vpop.f32.mrf.mxu0
  %1021 = vdwg.mxu0
  %1022 = vmatpush.bf16.msra.mxu0 0
  %1023 = vmatpush.bf16.msra.mxu0 0
  %1024 = vmatpush.bf16.msra.mxu0 0
  %1025 = vmatpush.bf16.msra.mxu0 0
  %1026 = vmatpush.bf16.msra.mxu0 0
  %1027 = vmatpush.bf16.msra.mxu0 0
  %1028 = vmatpush.bf16.msra.mxu0 0
  %1029 = vmatpush.bf16.msra.mxu0 %v1001
  %1030 = vmatmul.bf16.gmra.mxu0 %v992
  %v1031 = vpop.f32.mrf.mxu0
  %v1032 = vadd.f32 0.0, %v1031
  %v1033 = vpop.f32.mrf.mxu0
  %1034 = vdwg.mxu0
  %1035 = vmatpush.bf16.msra.mxu0 0
  %1036 = vmatpush.bf16.msra.mxu0 0
  %1037 = vmatpush.bf16.msra.mxu0 0
  %1038 = vmatpush.bf16.msra.mxu0 0
  %1039 = vmatpush.bf16.msra.mxu0 0
  %1040 = vmatpush.bf16.msra.mxu0 0
  %1041 = vmatpush.bf16.msra.mxu0 0
  %1042 = vmatpush.bf16.msra.mxu0 %v1004
  %1043 = vmatmul.bf16.gmra.mxu0 %v992
  %v1044 = vpop.f32.mrf.mxu0
  %v1045 = vadd.f32 0.0, %v1044
  %v1046 = vpop.f32.mrf.mxu0
  %1047 = vdwg.mxu0
  %1048 = vmatpush.bf16.msra.mxu0 0
  %1049 = vmatpush.bf16.msra.mxu0 0
  %1050 = vmatpush.bf16.msra.mxu0 0
  %1051 = vmatpush.bf16.msra.mxu0 0
  %1052 = vmatpush.bf16.msra.mxu0 0
  %1053 = vmatpush.bf16.msra.mxu0 0
  %1054 = vmatpush.bf16.msra.mxu0 0
  %1055 = vmatpush.bf16.msra.mxu0 %v1007
  %1056 = vmatmul.bf16.gmra.mxu0 %v992
  %v1057 = vpop.f32.mrf.mxu0
  %v1058 = vadd.f32 0.0, %v1057
  %v1059 = vpop.f32.mrf.mxu0
  %1060 = vdwg.mxu0
  %v1065 = vrot.slane %v1032, 7
  %v1066 = vrot.slane %v1045, 6
  %v1067 = vrot.slane %v1058, 5
  %vm1068 = vcmask 1040384
  %v1069 = vsel %vm1068, %v1019, %v1065
  %vm1070 = vcmask 1042434
  %v1071 = vsel %vm1070, %v1066, %v1067
  %vm1072 = vcmask 1041408
  %v1073 = vsel %vm1072, %v1069, %v1071
  %v1075 = vlaneseq
  %vm1076 = vcmp.ge.s32.totalorder %v1075, 0
  %vm1077 = vcmp.lt.s32.totalorder %v1075, 512
  %vm1078 = vmand %vm1076, %vm1077
  %1079 = vst.msk [vmem:[%s7] sm:$0xf] %vm1078, %v1073
  // Predicated region
  $region30: #{sts2d_forward.1} parent=0 // pred_check
    _
  $region31: #{sts2d_forward.1} parent=0 // pred_check_branch
    %1081 = sbr.rel (0) target = $region33
  $region32: #{sts2d_forward.1} parent=0 // pred_region
    _
  $region33: #{sts2d_forward.1} parent=0 // pred_fallthru
    _
  // Predicated region
  $region34: #{sts2d_forward.1} parent=0 // pred_check
    _
  $region35: #{sts2d_forward.1} parent=0 // pred_check_branch
    %1083 = sbr.rel (0) target = $region37
  $region36: #{sts2d_forward.1} parent=0 // pred_region
    _
  $region37: #{sts2d_forward.1} parent=0 // pred_fallthru
    _

</llo_original>
